<compile_context>
chip_gen: v6e
topology: v6e:2x2x1
jax: 0.10.0
libtpu: 0.0.40
codegen_flags: <defaults>
</compile_context>

<pallas_src>
import functools

import jax
import jax.numpy as jnp
from jax.experimental import pallas as pl
from jax.experimental.pallas import tpu as pltpu


def _var_dim0_kernel(x_ref, o_ref, s_ref, ss_ref, *, inv_n):
    # x_ref:  (TB, TN) tile of the flattened [B, N] input, resident in VMEM.
    # o_ref:  (1, TN) lane-dense output tile (same tile across the B axis).
    # s_ref / ss_ref: (1, TN) f32 accumulators (sum, sum of squares).
    b = pl.program_id(1)

    @pl.when(b == 0)
    def _init():
        s_ref[...] = jnp.zeros_like(s_ref)
        ss_ref[...] = jnp.zeros_like(ss_ref)

    # Single sweep over the tile: fused sum / sum-of-squares (one VMEM read).
    x = x_ref[...].astype(jnp.float32)
    s_ref[...] += jnp.sum(x, axis=0, keepdims=True)
    ss_ref[...] += jnp.sum(x * x, axis=0, keepdims=True)

    @pl.when(b == pl.num_programs(1) - 1)
    def _finalize():
        mean = s_ref[...] * inv_n
        # biased variance (correction = 0): E[x^2] - E[x]^2
        var = ss_ref[...] * inv_n - mean * mean
        o_ref[...] = var.astype(o_ref.dtype)


def _largest_divisor_tile(total, candidates, fallback):
    for c in candidates:
        if total % c == 0:
            return c
    return fallback


def _vmem_limit_bytes():
    # Raise the scoped-VMEM limit where it is safe (half of physical capacity,
    # capped at 64 MiB) so larger tiles + double buffering fit on v5e/v6e.
    try:
        cap = pltpu.get_tpu_info().vmem_capacity_bytes
    except Exception:
        cap = 128 * 1024 * 1024
    return min(64 * 1024 * 1024, cap // 2)


def var_dim0_biased(x):
    """Pallas implementation of aten.var(x, dim=0, unbiased=False, keepdim=True)."""
    B, S, H = x.shape
    N = S * H
    x2 = x.reshape(B, N)

    # Lane-dense tile over the flattened non-reduced axis (multiple of 128 when
    # possible, otherwise the full axis which is always legal).
    TN = _largest_divisor_tile(N, (2048, 1024, 512, 384, 256, 128), N)
    # Reduction-axis tile: multiple of 8 sublanes when possible, else full B.
    TB = _largest_divisor_tile(B, (256, 128, 64, 32, 16, 8), B)

    grid = (N // TN, B // TB)  # (parallel, reduction-last)

    out2 = pl.pallas_call(
        functools.partial(_var_dim0_kernel, inv_n=1.0 / float(B)),
        out_shape=jax.ShapeDtypeStruct((1, N), jnp.float32),
        grid=grid,
        in_specs=[pl.BlockSpec((TB, TN), lambda n, b: (b, n))],
        out_specs=pl.BlockSpec((1, TN), lambda n, b: (0, n)),
        scratch_shapes=[
            pltpu.VMEM((1, TN), jnp.float32),  # running sum
            pltpu.VMEM((1, TN), jnp.float32),  # running sum of squares
        ],
        compiler_params=pltpu.CompilerParams(
            dimension_semantics=("parallel", "arbitrary"),
            vmem_limit_bytes=_vmem_limit_bytes(),
        ),
    )(x2)

    return out2.reshape(1, S, H)


if __name__ == "__main__":
    key = jax.random.PRNGKey(0)
    B, S, H = 4, 8, 32
    x = jax.random.normal(key, (B, S, H), dtype=jnp.float32)

    out = var_dim0_biased(x)
    out = jax.block_until_ready(out)

    # reference: biased variance over dim 0 with keepdims
    ref = jnp.var(x, axis=0, ddof=0, keepdims=True)

    assert out.shape == (1, S, H), out.shape
    assert jnp.allclose(out, ref, rtol=1e-5, atol=1e-5), (out, ref)
    print("KERNEL_OK")
</pallas_src>

<mosaic_0001>
module attributes {stable_mosaic.version = 11 : i64} {
  func.func @_var_dim0_kernel(%arg0: i32, %arg1: i32, %arg2: memref<4x256xf32, #tpu.memory_space<vmem>>, %arg3: memref<1x256xf32, #tpu.memory_space<vmem>>, %arg4: memref<1x256xf32, #tpu.memory_space<vmem>>, %arg5: memref<1x256xf32, #tpu.memory_space<vmem>>) attributes {dimension_semantics = [#tpu.dimension_semantics<parallel>, #tpu.dimension_semantics<arbitrary>], iteration_bounds = array<i64: 1, 1>, scalar_prefetch = 0 : i64, scratch_operands = 2 : i64, tpu.core_type = #tpu.core_type<tc>, window_params = [{transform_indices = @transform_0, window_bounds = array<i64: 4, 256>}, {transform_indices = @transform_1, window_bounds = array<i64: 1, 256>}]} {
    %c0_i32 = arith.constant 0 : i32
    %0 = arith.cmpi eq, %arg1, %c0_i32 : i32
    %1 = arith.extui %0 : i1 to i32
    %c0_i32_0 = arith.constant 0 : i32
    %2 = arith.cmpi ne, %1, %c0_i32_0 : i32
    scf.if %2 {
      %cst_13 = arith.constant 0.000000e+00 : f32
      %18 = vector.broadcast %cst_13 : f32 to vector<1x256xf32>
      %c0_14 = arith.constant 0 : index
      %c0_15 = arith.constant 0 : index
      %19 = vector.load %arg4[%c0_14, %c0_15] : memref<1x256xf32, #tpu.memory_space<vmem>>, vector<1x256xf32>
      tpu.vector_store %arg4[%c0_14, %c0_15], %18 {strides = array<i32>} : memref<1x256xf32, #tpu.memory_space<vmem>>, vector<1x256xf32>,
      %cst_16 = arith.constant 0.000000e+00 : f32
      %20 = vector.broadcast %cst_16 : f32 to vector<1x256xf32>
      %c0_17 = arith.constant 0 : index
      %c0_18 = arith.constant 0 : index
      %21 = vector.load %arg5[%c0_17, %c0_18] : memref<1x256xf32, #tpu.memory_space<vmem>>, vector<1x256xf32>
      tpu.vector_store %arg5[%c0_17, %c0_18], %20 {strides = array<i32>} : memref<1x256xf32, #tpu.memory_space<vmem>>, vector<1x256xf32>,
    } else {
    }
    %c0 = arith.constant 0 : index
    %c0_1 = arith.constant 0 : index
    %3 = vector.load %arg2[%c0, %c0_1] : memref<4x256xf32, #tpu.memory_space<vmem>>, vector<4x256xf32>
    %c0_2 = arith.constant 0 : index
    %c0_3 = arith.constant 0 : index
    %4 = vector.load %arg4[%c0_2, %c0_3] : memref<1x256xf32, #tpu.memory_space<vmem>>, vector<1x256xf32>
    %cst = arith.constant dense<0.000000e+00> : vector<256xf32>
    %5 = vector.multi_reduction <add>, %3, %cst [0] : vector<4x256xf32> to vector<256xf32>
    %6 = vector.shape_cast %5 : vector<256xf32> to vector<1x256xf32>
    %7 = arith.addf %4, %6 : vector<1x256xf32>
    %c0_4 = arith.constant 0 : index
    %c0_5 = arith.constant 0 : index
    %8 = vector.load %arg4[%c0_4, %c0_5] : memref<1x256xf32, #tpu.memory_space<vmem>>, vector<1x256xf32>
    tpu.vector_store %arg4[%c0_4, %c0_5], %7 {strides = array<i32>} : memref<1x256xf32, #tpu.memory_space<vmem>>, vector<1x256xf32>,
    %c0_6 = arith.constant 0 : index
    %c0_7 = arith.constant 0 : index
    %9 = vector.load %arg5[%c0_6, %c0_7] : memref<1x256xf32, #tpu.memory_space<vmem>>, vector<1x256xf32>
    %10 = arith.mulf %3, %3 : vector<4x256xf32>
    %cst_8 = arith.constant dense<0.000000e+00> : vector<256xf32>
    %11 = vector.multi_reduction <add>, %10, %cst_8 [0] : vector<4x256xf32> to vector<256xf32>
    %12 = vector.shape_cast %11 : vector<256xf32> to vector<1x256xf32>
    %13 = arith.addf %9, %12 : vector<1x256xf32>
    %c0_9 = arith.constant 0 : index
    %c0_10 = arith.constant 0 : index
    %14 = vector.load %arg5[%c0_9, %c0_10] : memref<1x256xf32, #tpu.memory_space<vmem>>, vector<1x256xf32>
    tpu.vector_store %arg5[%c0_9, %c0_10], %13 {strides = array<i32>} : memref<1x256xf32, #tpu.memory_space<vmem>>, vector<1x256xf32>,
    %c0_i32_11 = arith.constant 0 : i32
    %15 = arith.cmpi eq, %arg1, %c0_i32_11 : i32
    %16 = arith.extui %15 : i1 to i32
    %c0_i32_12 = arith.constant 0 : i32
    %17 = arith.cmpi ne, %16, %c0_i32_12 : i32
    scf.if %17 {
      %c0_13 = arith.constant 0 : index
      %c0_14 = arith.constant 0 : index
      %18 = vector.load %arg4[%c0_13, %c0_14] : memref<1x256xf32, #tpu.memory_space<vmem>>, vector<1x256xf32>
      %cst_15 = arith.constant 2.500000e-01 : f32
      %19 = vector.broadcast %cst_15 : f32 to vector<1x256xf32>
      %20 = arith.mulf %18, %19 : vector<1x256xf32>
      %c0_16 = arith.constant 0 : index
      %c0_17 = arith.constant 0 : index
      %21 = vector.load %arg5[%c0_16, %c0_17] : memref<1x256xf32, #tpu.memory_space<vmem>>, vector<1x256xf32>
      %cst_18 = arith.constant 2.500000e-01 : f32
      %22 = vector.broadcast %cst_18 : f32 to vector<1x256xf32>
      %23 = arith.mulf %21, %22 : vector<1x256xf32>
      %24 = arith.mulf %20, %20 : vector<1x256xf32>
      %25 = arith.subf %23, %24 : vector<1x256xf32>
      %c0_19 = arith.constant 0 : index
      %c0_20 = arith.constant 0 : index
      %26 = vector.load %arg3[%c0_19, %c0_20] : memref<1x256xf32, #tpu.memory_space<vmem>>, vector<1x256xf32>
      tpu.vector_store %arg3[%c0_19, %c0_20], %25 {strides = array<i32>} : memref<1x256xf32, #tpu.memory_space<vmem>>, vector<1x256xf32>,
    } else {
    }
    return
  }
  func.func @transform_0(%arg0: i32, %arg1: i32) -> (i32, i32) {
    %c0_i32 = arith.constant 0 : i32
    return %arg1, %arg0 : i32, i32
  }
  func.func @transform_1(%arg0: i32, %arg1: i32) -> (i32, i32) {
    %c0_i32 = arith.constant 0 : i32
    %c0_i32_0 = arith.constant 0 : i32
    return %c0_i32, %arg0 : i32, i32
  }
}

</mosaic_0001>

<llo_original>
// kernel: tpu_custom_call.1
$region0: #{tpu_custom_call.1}
  #allocation0 [shape = 'u32[]', space=smem, size = 0x4, offset = 0x4, fixed_abs, tag = 'smem constant byte address 0x4 - core index']
  #allocation1 [shape = 'u32[144,128]{1,0:T(1,128)}', space=vmem, size = 0x12000, scoped, tag = 'internal scratch']
  #allocation2 [shape = 'f32[1,256]{1,0:T(1,128)}', space=vmem, size = 0x400, scoped, tag = 'scratch operand']
  #allocation3 [shape = 'f32[1,256]{1,0:T(1,128)}', space=vmem, size = 0x400, scoped, tag = 'scratch operand']
  %s0 = inlined_call_operand.hbm [shape: f32[4,256], index: 0, kind: input, shape index: {}]
  %s1 = inlined_call_operand.hbm [shape: f32[1,256], index: 1, kind: output, shape index: {}]
  %s2 = sld [smem:[#allocation0]]
  $region26: #{tpu_custom_call.1} parent=0
    _
  %s4 = ssub.s32 1, %s2
  %s5 = scalar_select 0, %s4, %s2
  $region1: #{tpu_custom_call.1} parent=0
    #allocation4 [shape = 'u8[4096]{0}', space=vmem, size = 0x1000, scoped, tag = 'input window, operand 0, single buffered']
    #allocation5 [shape = 's32[1]{0}', space=sflag, size = 0x4, scoped, tag = 'scoped memory for tpu_custom_call.1']
    #allocation6 [shape = 's32[1]{0}', space=sflag, size = 0x4, scoped, tag = 'scoped memory for tpu_custom_call.1']
    #allocation7 [shape = 'u8[1024]{0}', space=vmem, size = 0x400, scoped, tag = 'output window, operand 0, single buffered']
    %6 = vsyncpa [#allocation5], 0
    %7 = vsyncpa [#allocation6], 0
    // Predicated region
    $region2: #{tpu_custom_call.1} parent=1 // pred_check
      _
    $region3: #{tpu_custom_call.1} parent=1 // pred_check_branch
      %9 = sbr.rel (0) target = $region5
    $region4: #{tpu_custom_call.1} parent=1 // pred_region
      %s11 = ssub.s32 128, 128
      %12 = vsyncadd [#allocation5], %s11
      %s14 = sshll.u32 [#allocation4], 4
      %s15 = int_to_ptr.vmem [resolvable:$true] %s14
      %17 = dma.hbm_to_vmem [thread:$0]  %s0, 128, %s15, [#allocation5]
    $region5: #{tpu_custom_call.1} parent=1 // pred_fallthru
      _
    // Predicated region
    $region6: #{tpu_custom_call.1} parent=1 // pred_check
      _
    $region7: #{tpu_custom_call.1} parent=1 // pred_check_branch
      %19 = sbr.rel (0) target = $region9
    $region8: #{tpu_custom_call.1} parent=1 // pred_region
      %20 = dma.done [#allocation5], 128
    $region9: #{tpu_custom_call.1} parent=1 // pred_fallthru
      _
    %p21 = scmp.eq.s32.totalorder 0, 0
    // Predicated region
    $region10: #{tpu_custom_call.1} parent=1 // pred_check
      %p22 = pneg %p21
    $region11: #{tpu_custom_call.1} parent=1 // pred_check_branch
      %24 = sbr.rel (%p22) target = $region13
    $region12: #{tpu_custom_call.1} parent=1 // pred_region
      %v25 = vlaneseq
      %vm26 = vcmp.ge.s32.totalorder %v25, 0
      %vm27 = vcmp.lt.s32.totalorder %v25, 256
      %vm28 = vmand %vm26, %vm27
      %29 = vst.msk [vmem:[#allocation2] sm:$0x3] %vm28, 0.0
      %30 = vst.msk [vmem:[#allocation3] sm:$0x3] %vm28, 0.0
    $region13: #{tpu_custom_call.1} parent=1 // pred_fallthru
      _
    %v31 = vld [vmem:[#allocation4] sm:$0xff]
    %v32 = vld [vmem:[#allocation2] sm:$0x3]
    %v34 = vcombine.high %v31, %v31
    %vm36 = vcmask 1043456
    %v37 = vsel %vm36, %v31, 0.0
    %v38 = vrot.slane %v37, 4
    %v39 = vadd.f32 %v37, %v38
    %v40 = vrot.slane %v39, 2
    %v41 = vadd.f32 %v39, %v40
    %v42 = vrot.slane %v41, 1
    %v43 = vadd.f32 %v41, %v42
    %v44 = vsel %vm36, %v34, 0.0
    %v45 = vrot.slane %v44, 4
    %v46 = vadd.f32 %v44, %v45
    %v47 = vrot.slane %v46, 2
    %v48 = vadd.f32 %v46, %v47
    %v49 = vrot.slane %v48, 1
    %v50 = vadd.f32 %v48, %v49
    %v53 = vcombine.low %v43, %v50
    %v55 = vunpack.c.l.s4 1966171168
    %v56 = vunpack.c.0.s8 %v55
    %v57 = vlaneseq
    %v58 = vshrl.u32 %v57, 7
    %v59 = vsub.s32 %v56, %v58
    %v60 = vrot.slane %v53, %v59
    %v62 = vunpack.c.l.s4 1966171168
    %v63 = vunpack.c.0.s8 %v62
    %v64 = vlaneseq
    %v65 = vshrl.u32 %v64, 7
    %v66 = vsub.s32 %v63, %v65
    %v67 = vrot.slane %v60, %v66
    %v69 = vadd.f32 %v32, %v67
    %v70 = vlaneseq
    %vm71 = vcmp.ge.s32.totalorder %v70, 0
    %vm72 = vcmp.lt.s32.totalorder %v70, 256
    %vm73 = vmand %vm71, %vm72
    %74 = vst.msk [vmem:[#allocation2] sm:$0x3] %vm73, %v69
    %v75 = vld [vmem:[#allocation3] sm:$0x3]
    %v76 = vmul.f32 %v31, %v31
    %v78 = vcombine.high %v76, %v76
    %v80 = vsel %vm36, %v76, 0.0
    %v81 = vrot.slane %v80, 4
    %v82 = vadd.f32 %v80, %v81
    %v83 = vrot.slane %v82, 2
    %v84 = vadd.f32 %v82, %v83
    %v85 = vrot.slane %v84, 1
    %v86 = vadd.f32 %v84, %v85
    %v87 = vsel %vm36, %v78, 0.0
    %v88 = vrot.slane %v87, 4
    %v89 = vadd.f32 %v87, %v88
    %v90 = vrot.slane %v89, 2
    %v91 = vadd.f32 %v89, %v90
    %v92 = vrot.slane %v91, 1
    %v93 = vadd.f32 %v91, %v92
    %v96 = vcombine.low %v86, %v93
    %v98 = vunpack.c.l.s4 1966171168
    %v99 = vunpack.c.0.s8 %v98
    %v100 = vlaneseq
    %v101 = vshrl.u32 %v100, 7
    %v102 = vsub.s32 %v99, %v101
    %v103 = vrot.slane %v96, %v102
    %v105 = vunpack.c.l.s4 1966171168
    %v106 = vunpack.c.0.s8 %v105
    %v107 = vlaneseq
    %v108 = vshrl.u32 %v107, 7
    %v109 = vsub.s32 %v106, %v108
    %v110 = vrot.slane %v103, %v109
    %v112 = vadd.f32 %v75, %v110
    %113 = vst.msk [vmem:[#allocation3] sm:$0x3] %vm73, %v112
    // Predicated region
    $region14: #{tpu_custom_call.1} parent=1 // pred_check
      %p114 = pneg %p21
    $region15: #{tpu_custom_call.1} parent=1 // pred_check_branch
      %116 = sbr.rel (%p114) target = $region17
    $region16: #{tpu_custom_call.1} parent=1 // pred_region
      %v117 = vld [vmem:[#allocation2] sm:$0x3]
      %v118 = vmul.f32 %v117, 0.25
      %v119 = vld [vmem:[#allocation3] sm:$0x3]
      %v120 = vmul.f32 %v119, 0.25
      %v121 = vmul.f32 %v118, %v118
      %v122 = vsub.f32 %v120, %v121
      %123 = vst.msk [vmem:[#allocation7] sm:$0x3] %vm73, %v122
    $region17: #{tpu_custom_call.1} parent=1 // pred_fallthru
      _
    // Predicated region
    $region18: #{tpu_custom_call.1} parent=1 // pred_check
      _
    $region19: #{tpu_custom_call.1} parent=1 // pred_check_branch
      %125 = sbr.rel (0) target = $region21
    $region20: #{tpu_custom_call.1} parent=1 // pred_region
      %s127 = ssub.s32 32, 32
      %128 = vsyncadd [#allocation6], %s127
      %s130 = sshll.u32 [#allocation7], 4
      %s131 = int_to_ptr.vmem [resolvable:$true] %s130
      %133 = dma.vmem_to_hbm [thread:$0]  %s131, 32, %s1, [#allocation6]
    $region21: #{tpu_custom_call.1} parent=1 // pred_fallthru
      _
    // Predicated region
    $region22: #{tpu_custom_call.1} parent=1 // pred_check
      _
    $region23: #{tpu_custom_call.1} parent=1 // pred_check_branch
      %135 = sbr.rel (0) target = $region25
    $region24: #{tpu_custom_call.1} parent=1 // pred_region
      %136 = dma.done [#allocation6], 32
    $region25: #{tpu_custom_call.1} parent=1 // pred_fallthru
      _
    %137 = vsyncpa [#allocation5], 1
    %138 = vsyncpa [#allocation6], 1

</llo_original>
